<compile_context>
chip_gen: v6e
topology: v6e:2x2x1
jax: 0.10.0
libtpu: 0.0.40
codegen_flags: <defaults>
</compile_context>

<pallas_src>
import jax
import jax.numpy as jnp
from jax.experimental import pallas as pl
from jax.experimental.pallas import tpu as pltpu


# ------------------------------------------------------------------ kernels


def _concat_kernel(x_ref, mask_ref, out_ref):
    """Copy the pre-selected x channel into out[:, 0] and mask into out[:, 1:].

    x_ref:    (1, 1, 1, TS)   -- only the selected channel of x, lane-dense
    mask_ref: (1, Cm, TS)
    out_ref:  (1, 1+Cm, TS)
    """
    out_ref[:, 0:1, :] = x_ref[:, 0]
    out_ref[:, 1:, :] = mask_ref[...]


def _mask_only_kernel(mask_ref, out_ref):
    """normalize_output=True path: channel 0 is zeros, x never touches HBM/VMEM."""
    out_ref[:, 0:1, :] = jnp.zeros((1, 1, out_ref.shape[2]), dtype=out_ref.dtype)
    out_ref[:, 1:, :] = mask_ref[...]


# ------------------------------------------------------------------ wrapper


def _pick_spatial_tile(hw, bytes_per_elem, n_channels_in_flight):
    """Largest lane-aligned tile along the flattened spatial axis.

    Keeps (all channels in flight) * tile * dtype * 2 (double-buffering) well
    under v7x's 32 MiB scoped-VMEM default while staying big enough to
    amortize the ~0.35us per-grid-step overhead on v5e/v6e.
    """
    budget_bytes = 4 * 1024 * 1024  # per pipeline stage, all blocks together
    cap = budget_bytes // (bytes_per_elem * max(1, n_channels_in_flight))
    cap = max(128, (cap // 128) * 128)
    if hw <= cap:
        return hw                    # full extent: always a legal block shape
    if hw % 128 != 0:
        # Not lane-aligned: use the full extent (legal), accept the big block.
        return hw
    return cap                       # multiple of 128, ragged tail is masked


def baseline_forward(
    x,
    mask,
    *,
    border_size=0,
    normalize_output=False,
    use_diff_dem=True,
):
    """Pallas implementation of Baseline.forward(x, mask)."""
    batch, p, nx, ny = x.shape
    mb, cm, mh, mw = mask.shape
    assert mb == batch and mh == nx and mw == ny
    mask = mask.astype(x.dtype)

    b = border_size
    d = 4 if use_diff_dem else 0
    timestep = (p - d) // 3
    dim = p - timestep  # static channel index selected from x

    out_h, out_w = nx - 2 * b, ny - 2 * b
    out_c = 1 + cm
    hw = out_h * out_w
    bytes_per_elem = jnp.dtype(x.dtype).itemsize

    if b:
        # Crop once in the wrapper so the kernel sees contiguous lane-dense data.
        x_flat = x[:, dim:dim + 1, b:-b, b:-b].reshape(batch, 1, 1, hw)
        mask_flat = mask[:, :, b:-b, b:-b].reshape(batch, cm, hw)
        dim_flat, p_flat = 0, 1
    else:
        x_flat = x.reshape(batch, p, 1, nx * ny)
        mask_flat = mask.reshape(batch, cm, hw)
        dim_flat, p_flat = dim, p

    n_in_flight = (0 if normalize_output else 1) + cm + out_c
    ts = _pick_spatial_tile(hw, bytes_per_elem, n_in_flight)
    grid_s = pl.cdiv(hw, ts)

    mask_spec = pl.BlockSpec((1, cm, ts), lambda i, s: (i, 0, s))
    out_spec = pl.BlockSpec((1, out_c, ts), lambda i, s: (i, 0, s))
    out_shape = jax.ShapeDtypeStruct((batch, out_c, hw), x.dtype)

    bytes_accessed = (
        (0 if normalize_output else batch * hw * bytes_per_elem)  # x channel read
        + batch * cm * hw * bytes_per_elem                        # mask read
        + batch * out_c * hw * bytes_per_elem                     # output write
    )
    cost = pl.CostEstimate(flops=0, transcendentals=0,
                           bytes_accessed=bytes_accessed)
    cparams = pltpu.CompilerParams(
        dimension_semantics=("parallel", "parallel"))

    if normalize_output:
        out3 = pl.pallas_call(
            _mask_only_kernel,
            out_shape=out_shape,
            grid=(batch, grid_s),
            in_specs=[mask_spec],
            out_specs=out_spec,
            compiler_params=cparams,
            cost_estimate=cost,
        )(mask_flat)
    else:
        # Only the selected channel `dim_flat` of x is ever DMA'd into VMEM.
        x_spec = pl.BlockSpec((1, 1, 1, ts), lambda i, s: (i, dim_flat, 0, s))
        out3 = pl.pallas_call(
            _concat_kernel,
            out_shape=out_shape,
            grid=(batch, grid_s),
            in_specs=[x_spec, mask_spec],
            out_specs=out_spec,
            compiler_params=cparams,
            cost_estimate=cost,
        )(x_flat, mask_flat)

    return out3.reshape(batch, out_c, out_h, out_w)


# ------------------------------------------------------------------ reference


def baseline_reference(x, mask, *, border_size=0, normalize_output=False,
                       use_diff_dem=True):
    """Pure-JAX reference mirroring the PyTorch module exactly."""
    batch, p, nx, ny = x.shape
    b = border_size
    if normalize_output:
        out = jnp.zeros((batch, 1, nx, ny), dtype=x.dtype)
    else:
        d = 4 if use_diff_dem else 0
        timestep = (p - d) // 3
        dim = p - timestep
        out = x[:, dim:dim + 1]
    out = jnp.concatenate([out, mask.astype(x.dtype)], axis=1)
    if b:
        out = out[:, :, b:-b, b:-b]
    return out


if __name__ == "__main__":
    key = jax.random.PRNGKey(0)
    kx, km = jax.random.split(key)

    # Shapes consistent with the module: batch=2, p=7 channels
    # (use_diff_dem=True -> d=4, timestep=(7-4)//3=1, dim=6), spatial 16x16,
    # mask with 1 channel.
    batch, p, nx, ny = 2, 7, 16, 16
    x = jax.random.normal(kx, (batch, p, nx, ny), dtype=jnp.float32)
    mask = (jax.random.uniform(km, (batch, 1, nx, ny)) > 0.5).astype(jnp.float32)

    # Default flags (the main path).
    out = baseline_forward(x, mask, border_size=0,
                           normalize_output=False, use_diff_dem=True)
    out = jax.block_until_ready(out)
    ref = baseline_reference(x, mask, border_size=0,
                             normalize_output=False, use_diff_dem=True)
    assert out.shape == ref.shape, (out.shape, ref.shape)
    assert jnp.allclose(out, ref), "mismatch vs reference (default flags)"

    # normalize_output=True path (x never DMA'd).
    out_n = jax.block_until_ready(
        baseline_forward(x, mask, normalize_output=True))
    ref_n = baseline_reference(x, mask, normalize_output=True)
    assert jnp.allclose(out_n, ref_n), "mismatch vs reference (normalize_output)"

    # border_size>0 path (crop applied before the kernel).
    out_b = jax.block_until_ready(
        baseline_forward(x, mask, border_size=2))
    ref_b = baseline_reference(x, mask, border_size=2)
    assert out_b.shape == ref_b.shape, (out_b.shape, ref_b.shape)
    assert jnp.allclose(out_b, ref_b), "mismatch vs reference (border_size=2)"

    print("KERNEL_OK")
</pallas_src>

<mosaic_0001>
module attributes {stable_mosaic.version = 11 : i64} {
  func.func @_concat_kernel(%arg0: i32, %arg1: i32, %arg2: memref<1x1x1x256xf32, #tpu.memory_space<vmem>>, %arg3: memref<1x1x256xf32, #tpu.memory_space<vmem>>, %arg4: memref<1x2x256xf32, #tpu.memory_space<vmem>>) attributes {dimension_semantics = [#tpu.dimension_semantics<parallel>, #tpu.dimension_semantics<parallel>], iteration_bounds = array<i64: 2, 1>, scalar_prefetch = 0 : i64, scratch_operands = 0 : i64, tpu.core_type = #tpu.core_type<tc>, window_params = [{transform_indices = @transform_0, window_bounds = array<i64: 1, 1, 1, 256>}, {transform_indices = @transform_1, window_bounds = array<i64: 1, 1, 256>}, {transform_indices = @transform_2, window_bounds = array<i64: 1, 2, 256>}]} {
    %c0 = arith.constant 0 : index
    %c0_0 = arith.constant 0 : index
    %c0_1 = arith.constant 0 : index
    %c0_2 = arith.constant 0 : index
    %0 = vector.load %arg2[%c0, %c0_0, %c0_1, %c0_2] : memref<1x1x1x256xf32, #tpu.memory_space<vmem>>, vector<1x1x1x256xf32>
    %1 = vector.shape_cast %0 : vector<1x1x1x256xf32> to vector<1x1x256xf32>
    %c0_3 = arith.constant 0 : index
    %c0_4 = arith.constant 0 : index
    %c0_5 = arith.constant 0 : index
    %2 = vector.load %arg4[%c0_3, %c0_4, %c0_5] : memref<1x2x256xf32, #tpu.memory_space<vmem>>, vector<1x1x256xf32>
    tpu.vector_store %arg4[%c0_3, %c0_4, %c0_5], %1 {strides = array<i32>} : memref<1x2x256xf32, #tpu.memory_space<vmem>>, vector<1x1x256xf32>,
    %c0_6 = arith.constant 0 : index
    %c0_7 = arith.constant 0 : index
    %c0_8 = arith.constant 0 : index
    %3 = vector.load %arg3[%c0_6, %c0_7, %c0_8] : memref<1x1x256xf32, #tpu.memory_space<vmem>>, vector<1x1x256xf32>
    %c0_9 = arith.constant 0 : index
    %c1 = arith.constant 1 : index
    %c0_10 = arith.constant 0 : index
    %4 = vector.load %arg4[%c0_9, %c1, %c0_10] : memref<1x2x256xf32, #tpu.memory_space<vmem>>, vector<1x1x256xf32>
    tpu.vector_store %arg4[%c0_9, %c1, %c0_10], %3 {strides = array<i32>} : memref<1x2x256xf32, #tpu.memory_space<vmem>>, vector<1x1x256xf32>,
    return
  }
  func.func @transform_0(%arg0: i32, %arg1: i32) -> (i32, i32, i32, i32) {
    %c6_i32 = arith.constant 6 : i32
    %c0_i32 = arith.constant 0 : i32
    %c0_i32_0 = arith.constant 0 : i32
    return %arg0, %c6_i32, %c0_i32, %arg1 : i32, i32, i32, i32
  }
  func.func @transform_1(%arg0: i32, %arg1: i32) -> (i32, i32, i32) {
    %c0_i32 = arith.constant 0 : i32
    %c0_i32_0 = arith.constant 0 : i32
    return %arg0, %c0_i32, %arg1 : i32, i32, i32
  }
  func.func @transform_2(%arg0: i32, %arg1: i32) -> (i32, i32, i32) {
    %c0_i32 = arith.constant 0 : i32
    %c0_i32_0 = arith.constant 0 : i32
    return %arg0, %c0_i32, %arg1 : i32, i32, i32
  }
}

</mosaic_0001>

<llo_original>
// kernel: tpu_custom_call.1
$region0: #{tpu_custom_call.1}
  #allocation0 [shape = 'u32[]', space=smem, size = 0x4, offset = 0x4, fixed_abs, tag = 'smem constant byte address 0x4 - core index']
  #allocation1 [shape = 'u32[144,128]{1,0:T(1,128)}', space=vmem, size = 0x12000, scoped, tag = 'internal scratch']
  %s0 = inlined_call_operand.hbm [shape: f32[2,7,1,256], index: 0, kind: input, shape index: {}]
  %s1 = inlined_call_operand.hbm [shape: f32[2,1,256], index: 1, kind: input, shape index: {}]
  %s2 = inlined_call_operand.hbm [shape: f32[2,2,256], index: 2, kind: output, shape index: {}]
  %s3 = sld [smem:[#allocation0]]
  $region49: #{tpu_custom_call.1} parent=0
    _
  %s5 = ssub.s32 1, %s3
  %s6 = scalar_select 0, %s5, %s3
  $region1: #{tpu_custom_call.1} parent=0
    #allocation2 [shape = 'u8[2048]{0}', space=vmem, size = 0x800, scoped, tag = 'input window, operand 0']
    #allocation3 [shape = 's32[2]{0}', space=sflag, size = 0x8, scoped, tag = 'scoped memory for tpu_custom_call.1']
    #allocation4 [shape = 's32[2]{0}', space=sflag, size = 0x8, scoped, tag = 'scoped memory for tpu_custom_call.1']
    #allocation5 [shape = 'u8[2048]{0}', space=vmem, size = 0x800, scoped, tag = 'input window, operand 1']
    #allocation6 [shape = 's32[2]{0}', space=sflag, size = 0x8, scoped, tag = 'scoped memory for tpu_custom_call.1']
    #allocation7 [shape = 'u8[4096]{0}', space=vmem, size = 0x1000, scoped, tag = 'output window, operand 0']
    %7 = vsyncpa [#allocation3], 0
    %s8 = scalar_lea.sflag [#allocation3], 1
    %9 = vsyncpa %s8, 0
    %10 = vsyncpa [#allocation6], 0
    %s11 = scalar_lea.sflag [#allocation6], 1
    %12 = vsyncpa %s11, 0
    %13 = vsyncpa [#allocation4], 0
    %s14 = scalar_lea.sflag [#allocation4], 1
    %15 = vsyncpa %s14, 0
    loop: start=0, step=1, limit=4
    $region2: #{tpu_custom_call.1} parent=1 // loop_pre_header
      _
    $region3: #{tpu_custom_call.1} parent=1 // loop_header
      %s17 = sphi 0, %s21
      %p18 = scmp.ge.s32.totalorder %s17, 4
      %s24 = sphi 0, %s36
      %s25 = sphi 0, %s32
      %s26 = sphi 0, %s24
      %s27 = sphi 0, %s25
      %s28 = sphi 0, %s26
      %s29 = sphi 0, %s27
      %s41 = sphi 0, %s43
      %s44 = sphi 0, %s41
      %s45 = sphi 0, %s44
      %s61 = sphi 0, %s45
      %s69 = sphi 0, %s71
      %s72 = sphi 0, %s69
      %s73 = sphi 0, %s72
      %s89 = sphi 0, %s73
      %s97 = sphi 0, %s99
      %s100 = sphi 0, %s97
      %s101 = sphi 0, %s100
      %s117 = sphi 0, %s101
    $region4: #{tpu_custom_call.1} parent=1 // loop_header_branch
      %20 = sbr.rel (%p18) target = $region8
    $region5: #{tpu_custom_call.1} parent=1 // loop_body
      %s22 = ssub.s32 %s17, 1
      %s23 = ssub.s32 %s17, 2
      %s30 = sadd.s32 1, %s25
      %p31 = scmp.ge.s32.totalorder %s30, 1
      %s32 = scalar_select %p31, 0, %s30
      %s33 = sadd.s32 1, %s24
      %s34 = scalar_select %p31, %s33, %s24
      %p35 = scmp.ge.s32.totalorder %s34, 2
      %s36 = scalar_select %p35, 0, %s34
      %s37 = ssub.s32 %s24, %s36
      %s38 = ssub.s32 %s25, %s32
      %s39 = sor.u32 %s37, %s38
      %p40 = scmp.eq.s32.totalorder %s39, 0
      %s42 = sadd.s32 %s41, 1
      %s43 = scalar_select %p40, %s41, %s42
      %p46 = pneg %p40
      %p47 = scmp.eq.s32.totalorder %s17, 1
      %p48 = por %p46, %p47
      %p49 = scmp.ne.s32.totalorder %s41, %s44
      %p50 = scmp.eq.s32.totalorder %s17, 0
      %p51 = por %p49, %p50
      %p52 = scmp.ne.s32.totalorder %s41, %s44
      %p53 = scmp.eq.s32.totalorder %s22, 1
      %p54 = por %p52, %p53
      %p55 = scmp.ne.s32.totalorder %s44, %s45
      %p56 = scmp.eq.s32.totalorder %s22, 0
      %p57 = por %p55, %p56
      %p58 = scmp.ne.s32.totalorder %s44, %s45
      %p59 = scmp.eq.s32.totalorder %s23, 1
      %p60 = por %p58, %p59
      %p62 = scmp.ne.s32.totalorder %s45, %s61
      %p63 = scmp.eq.s32.totalorder %s23, 0
      %p64 = por %p62, %p63
      %s65 = ssub.s32 %s24, %s36
      %s66 = ssub.s32 %s25, %s32
      %s67 = sor.u32 %s65, %s66
      %p68 = scmp.eq.s32.totalorder %s67, 0
      %s70 = sadd.s32 %s69, 1
      %s71 = scalar_select %p68, %s69, %s70
      %p74 = pneg %p68
      %p75 = scmp.eq.s32.totalorder %s17, 1
      %p76 = por %p74, %p75
      %p77 = scmp.ne.s32.totalorder %s69, %s72
      %p78 = scmp.eq.s32.totalorder %s17, 0
      %p79 = por %p77, %p78
      %p80 = scmp.ne.s32.totalorder %s69, %s72
      %p81 = scmp.eq.s32.totalorder %s22, 1
      %p82 = por %p80, %p81
      %p83 = scmp.ne.s32.totalorder %s72, %s73
      %p84 = scmp.eq.s32.totalorder %s22, 0
      %p85 = por %p83, %p84
      %p86 = scmp.ne.s32.totalorder %s72, %s73
      %p87 = scmp.eq.s32.totalorder %s23, 1
      %p88 = por %p86, %p87
      %p90 = scmp.ne.s32.totalorder %s73, %s89
      %p91 = scmp.eq.s32.totalorder %s23, 0
      %p92 = por %p90, %p91
      %s93 = ssub.s32 %s24, %s36
      %s94 = ssub.s32 %s25, %s32
      %s95 = sor.u32 %s93, %s94
      %p96 = scmp.eq.s32.totalorder %s95, 0
      %s98 = sadd.s32 %s97, 1
      %s99 = scalar_select %p96, %s97, %s98
      %p102 = pneg %p96
      %p103 = scmp.eq.s32.totalorder %s17, 1
      %p104 = por %p102, %p103
      %p105 = scmp.ne.s32.totalorder %s97, %s100
      %p106 = scmp.eq.s32.totalorder %s17, 0
      %p107 = por %p105, %p106
      %p108 = scmp.ne.s32.totalorder %s97, %s100
      %p109 = scmp.eq.s32.totalorder %s22, 1
      %p110 = por %p108, %p109
      %p111 = scmp.ne.s32.totalorder %s100, %s101
      %p112 = scmp.eq.s32.totalorder %s22, 0
      %p113 = por %p111, %p112
      %p114 = scmp.ne.s32.totalorder %s100, %s101
      %p115 = scmp.eq.s32.totalorder %s23, 1
      %p116 = por %p114, %p115
      %p118 = scmp.ne.s32.totalorder %s101, %s117
      %p119 = scmp.eq.s32.totalorder %s23, 0
      %p120 = por %p118, %p119
      %p121 = scmp.le.s32.totalorder 1, %s17
      %p122 = scmp.lt.s32.totalorder %s17, 3
      %p123 = pnand %p121, %p122
      %p124 = pneg %p123
      // Predicated region
      $region9: #{tpu_custom_call.1} parent=5 // pred_check
        _
      $region10: #{tpu_custom_call.1} parent=5 // pred_check_branch
        %126 = sbr.rel (%p123) target = $region12
      $region11: #{tpu_custom_call.1} parent=5 // pred_region
        %s127 = ssub.s32 %s17, 1
      $region12: #{tpu_custom_call.1} parent=5 // pred_fallthru
        _
      %p128 = scmp.lt.s32.totalorder %s17, 2
      // Predicated region
      $region13: #{tpu_custom_call.1} parent=5 // pred_check
        %p129 = pneg %p128
      $region14: #{tpu_custom_call.1} parent=5 // pred_check_branch
        %131 = sbr.rel (%p129) target = $region16
      $region15: #{tpu_custom_call.1} parent=5 // pred_region
        // Predicated region
        $region17: #{tpu_custom_call.1} parent=15 // pred_check
          %p132 = pneg %p51
        $region18: #{tpu_custom_call.1} parent=15 // pred_check_branch
          %134 = sbr.rel (%p132) target = $region20
        $region19: #{tpu_custom_call.1} parent=15 // pred_region
          %s135 = sand.u32 %s41, 1
          %s136 = scalar_lea.sflag [#allocation3], %s135
          %s137 = sand.u32 %s41, 1
          %s138 = smul.addr %s137, 2
          %s139 = scalar_lea.vmem [#allocation2], %s138
          %s140 = smul.u32 2, %s25
          %s142 = ssub.s32 32, 32
          %143 = vsyncadd %s136, %s142
          %s144 = sadd.s32 %s140, 12
          %s145 = smul.addr %s24, 14
          %s146 = sadd.s32 %s144, %s145
          %s147 = smul.addr %s146, 16
          %s148 = scalar_lea.hbm %s0, %s147
          %s150 = sshll.u32 %s139, 4
          %s151 = int_to_ptr.vmem [resolvable:$true] %s150
          %153 = dma.hbm_to_vmem [thread:$0]  %s148, 32, %s151, %s136
        $region20: #{tpu_custom_call.1} parent=15 // pred_fallthru
          _
        // Predicated region
        $region21: #{tpu_custom_call.1} parent=15 // pred_check
          %p154 = pneg %p79
        $region22: #{tpu_custom_call.1} parent=15 // pred_check_branch
          %156 = sbr.rel (%p154) target = $region24
        $region23: #{tpu_custom_call.1} parent=15 // pred_region
          %s157 = sand.u32 %s69, 1
          %s158 = scalar_lea.sflag [#allocation6], %s157
          %s159 = sand.u32 %s69, 1
          %s160 = smul.addr %s159, 2
          %s161 = scalar_lea.vmem [#allocation5], %s160
          %s162 = smul.u32 2, %s25
          %s164 = ssub.s32 32, 32
          %165 = vsyncadd %s158, %s164
          %s166 = smul.addr %s24, 2
          %s167 = sadd.s32 %s162, %s166
          %s168 = smul.addr %s167, 16
          %s169 = scalar_lea.hbm %s1, %s168
          %s171 = sshll.u32 %s161, 4
          %s172 = int_to_ptr.vmem [resolvable:$true] %s171
          %174 = dma.hbm_to_vmem [thread:$0]  %s169, 32, %s172, %s158
        $region24: #{tpu_custom_call.1} parent=15 // pred_fallthru
          _
      $region16: #{tpu_custom_call.1} parent=5 // pred_fallthru
        _
      %p175 = scmp.le.s32.totalorder 1, %s17
      %p176 = scmp.lt.s32.totalorder %s17, 3
      %p177 = pnand %p175, %p176
      %p178 = pneg %p177
      // Predicated region
      $region25: #{tpu_custom_call.1} parent=5 // pred_check
        _
      $region26: #{tpu_custom_call.1} parent=5 // pred_check_branch
        %180 = sbr.rel (%p177) target = $region28
      $region27: #{tpu_custom_call.1} parent=5 // pred_region
        %s181 = ssub.s32 %s17, 1
        %s182 = sand.u32 %s44, 1
        %s183 = scalar_lea.sflag [#allocation3], %s182
        %s184 = sand.u32 %s44, 1
        %s185 = smul.addr %s184, 2
        %s186 = scalar_lea.vmem [#allocation2], %s185
        // Predicated region
        $region29: #{tpu_custom_call.1} parent=27 // pred_check
          %p187 = pneg %p57
        $region30: #{tpu_custom_call.1} parent=27 // pred_check_branch
          %189 = sbr.rel (%p187) target = $region32
        $region31: #{tpu_custom_call.1} parent=27 // pred_region
          %190 = dma.done %s183, 32
        $region32: #{tpu_custom_call.1} parent=27 // pred_fallthru
          _
        %s191 = sand.u32 %s72, 1
        %s192 = scalar_lea.sflag [#allocation6], %s191
        %s193 = sand.u32 %s72, 1
        %s194 = smul.addr %s193, 2
        %s195 = scalar_lea.vmem [#allocation5], %s194
        // Predicated region
        $region33: #{tpu_custom_call.1} parent=27 // pred_check
          %p196 = pneg %p85
        $region34: #{tpu_custom_call.1} parent=27 // pred_check_branch
          %198 = sbr.rel (%p196) target = $region36
        $region35: #{tpu_custom_call.1} parent=27 // pred_region
          %199 = dma.done %s192, 32
        $region36: #{tpu_custom_call.1} parent=27 // pred_fallthru
          _
        %s200 = sand.u32 %s44, 1
        %s201 = scalar_lea.sflag [#allocation3], %s200
        %s202 = sand.u32 %s44, 1
        %s203 = smul.addr %s202, 2
        %s204 = scalar_lea.vmem [#allocation2], %s203
        %p205 = pneg %p57
        %p206 = pneg %p54
        %s207 = sand.u32 %s72, 1
        %s208 = scalar_lea.sflag [#allocation6], %s207
        %s209 = sand.u32 %s72, 1
        %s210 = smul.addr %s209, 2
        %s211 = scalar_lea.vmem [#allocation5], %s210
        %p212 = pneg %p85
        %p213 = pneg %p82
        %p214 = pneg %p113
        %p215 = pneg %p110
        %s216 = sand.u32 %s100, 1
        %s217 = scalar_lea.sflag [#allocation4], %s216
        %s218 = sand.u32 %s100, 1
        %s219 = smul.addr %s218, 4
        %s220 = scalar_lea.vmem [#allocation7], %s219
        %s221 = smul.u32 2, %s27
        %s222 = smul.u32 2, %s27
        %s223 = smul.u32 2, %s27
        %v224 = vld [vmem:[%s186] sm:$0x3]
        %v225 = vlaneseq
        %vm226 = vcmp.ge.s32.totalorder %v225, 0
        %vm227 = vcmp.lt.s32.totalorder %v225, 256
        %vm228 = vmand %vm226, %vm227
        %229 = vst.msk [vmem:[%s220] ss:$2 sm:$0x3] %vm228, %v224
        %v230 = vld [vmem:[%s195] sm:$0x3]
        %s231 = scalar_lea.vmem %s220, 1 [#allocation7]
        %232 = vst.msk [vmem:[%s231] ss:$2 sm:$0x3] %vm228, %v230
        %s233 = sand.u32 %s100, 1
        %s234 = scalar_lea.sflag [#allocation4], %s233
        %s235 = sand.u32 %s100, 1
        %s236 = smul.addr %s235, 4
        %s237 = scalar_lea.vmem [#allocation7], %s236
        // Predicated region
        $region37: #{tpu_custom_call.1} parent=27 // pred_check
          %p238 = pneg %p110
        $region38: #{tpu_custom_call.1} parent=27 // pred_check_branch
          %240 = sbr.rel (%p238) target = $region40
        $region39: #{tpu_custom_call.1} parent=27 // pred_region
          %s241 = smul.u32 2, %s27
          %s243 = ssub.s32 64, 64
          %244 = vsyncadd %s234, %s243
          %s245 = smul.addr %s26, 2
          %s246 = sadd.s32 %s241, %s245
          %s247 = smul.addr %s246, 32
          %s248 = scalar_lea.hbm %s2, %s247
          %s250 = sshll.u32 %s237, 4
          %s251 = int_to_ptr.vmem [resolvable:$true] %s250
          %253 = dma.vmem_to_hbm [thread:$0]  %s251, 64, %s248, %s234
        $region40: #{tpu_custom_call.1} parent=27 // pred_fallthru
          _
      $region28: #{tpu_custom_call.1} parent=5 // pred_fallthru
        _
      %p254 = scmp.le.s32.totalorder 2, %s17
      // Predicated region
      $region41: #{tpu_custom_call.1} parent=5 // pred_check
        %p255 = pneg %p254
      $region42: #{tpu_custom_call.1} parent=5 // pred_check_branch
        %257 = sbr.rel (%p255) target = $region44
      $region43: #{tpu_custom_call.1} parent=5 // pred_region
        %s258 = ssub.s32 %s17, 2
        // Predicated region
        $region45: #{tpu_custom_call.1} parent=43 // pred_check
          %p259 = pneg %p116
        $region46: #{tpu_custom_call.1} parent=43 // pred_check_branch
          %261 = sbr.rel (%p259) target = $region48
        $region47: #{tpu_custom_call.1} parent=43 // pred_region
          %s262 = sand.u32 %s101, 1
          %s263 = scalar_lea.sflag [#allocation4], %s262
          %s264 = sand.u32 %s101, 1
          %s265 = smul.addr %s264, 4
          %s266 = scalar_lea.vmem [#allocation7], %s265
          %267 = dma.done %s263, 64
        $region48: #{tpu_custom_call.1} parent=43 // pred_fallthru
          _
      $region44: #{tpu_custom_call.1} parent=5 // pred_fallthru
        _
    $region6: #{tpu_custom_call.1} parent=1 // loop_footer
      %s21 = sadd.s32 1, %s17
    $region7: #{tpu_custom_call.1} parent=1 // loop_footer_branch
      %16 = sbr.rel target = $region3
    $region8: #{tpu_custom_call.1} parent=1 // loop_exit
      _
    %268 = vsyncpa [#allocation3], 1
    %s269 = scalar_lea.sflag [#allocation3], 1
    %270 = vsyncpa %s269, 1
    %271 = vsyncpa [#allocation6], 1
    %s272 = scalar_lea.sflag [#allocation6], 1
    %273 = vsyncpa %s272, 1
    %274 = vsyncpa [#allocation4], 1
    %s275 = scalar_lea.sflag [#allocation4], 1
    %276 = vsyncpa %s275, 1

</llo_original>
